<compile_context>
chip_gen: v5e
topology: v5e:2x2
jax: 0.10.0
libtpu: 0.0.40
codegen_flags: <defaults>
</compile_context>

<pallas_src>
import functools
import math

import numpy as np
import jax
import jax.numpy as jnp
from jax.experimental import pallas as pl
from jax.experimental.pallas import tpu as pltpu


# ----------------------------------------------------------------------------
# Helpers
# ----------------------------------------------------------------------------
def _round_up(x: int, m: int) -> int:
    return ((x + m - 1) // m) * m


def _hadamard_sign(n: int) -> jnp.ndarray:
    """Un-normalized +/-1 Hadamard (sign) matrix of size n x n (n power of 2)."""
    assert (n & (n - 1)) == 0, "Hadamard transform needs power-of-two dim"
    h = np.array([[1.0]], dtype=np.float32)
    while h.shape[0] < n:
        h = np.block([[h, h], [h, -h]])
    return jnp.asarray(h)


def _mxu_supports_int8() -> bool:
    """int8 x int8 -> int32 MXU path exists on v5e/v6e; v7x is bf16/fp8 only."""
    try:
        kind = jax.devices()[0].device_kind.lower()
    except Exception:  # pragma: no cover
        return False
    return ("v5" in kind) or ("v6" in kind)


# ----------------------------------------------------------------------------
# Pallas kernel
# ----------------------------------------------------------------------------
def _q8_linear_lora_kernel(x_ref, h_ref, wt_ref, wscale_ref, bias_ref,
                           laT_ref, lbT_ref,               # inputs
                           o_ref,                          # output
                           xq_ref, xscale_ref, la_ref,     # VMEM scratch (resident)
                           *, fuse_gelu: bool, use_int8: bool, dequant_const: float):
    j = pl.program_id(1)

    # --- once per M tile (x block is resident across the whole N sweep) ------
    @pl.when(j == 0)
    def _prepare():
        # Hadamard transform as bf16 +/-1 matmul, f32 accumulation (MXU).
        xh = jnp.dot(x_ref[...], h_ref[...],
                     preferred_element_type=jnp.float32)               # [tm, K]
        amax = jnp.max(jnp.abs(xh), axis=-1, keepdims=True)            # [tm, 1]
        # Exact divide once per M tile over [tm, 1] -> negligible, matches ref.
        inv = 127.0 / jnp.where(amax > 0.0, amax, jnp.float32(1.0))
        # xq = round(xh * 127 / amax)  (1/sqrt(K) cancels between xh and amax)
        xq = jnp.clip(jnp.round(xh * inv), -127.0, 127.0)
        xq_ref[...] = xq.astype(xq_ref.dtype)
        # dequant scale = amax / (127 * sqrt(K))  (folds Hadamard normalization)
        xscale_ref[...] = amax * dequant_const
        # LoRA down-projection on the un-transformed activations, cached.
        la_ref[...] = jnp.dot(x_ref[...], laT_ref[...],
                              preferred_element_type=jnp.float32
                              ).astype(la_ref.dtype)                   # [tm, r_pad]

    # --- quantized GEMM -------------------------------------------------------
    if use_int8:
        acc = jax.lax.dot_general(
            xq_ref[...], wt_ref[...],
            dimension_numbers=(((1,), (0,)), ((), ())),
            preferred_element_type=jnp.int32).astype(jnp.float32)      # [tm, tn]
    else:
        # 8-bit integer magnitudes are exact in bf16; f32 MXU accumulation.
        acc = jnp.dot(xq_ref[...], wt_ref[...].astype(jnp.bfloat16),
                      preferred_element_type=jnp.float32)              # [tm, tn]

    # --- dequant + bias -------------------------------------------------------
    out = acc * xscale_ref[...] * wscale_ref[...] + bias_ref[...]

    # --- LoRA up-projection ---------------------------------------------------
    out = out + jnp.dot(la_ref[...], lbT_ref[...],
                        preferred_element_type=jnp.float32)

    if fuse_gelu:
        out = 0.5 * out * (1.0 + jnp.tanh(
            0.7978845608028654 * (out + 0.044715 * out * out * out)))

    o_ref[...] = out.astype(o_ref.dtype)


# ----------------------------------------------------------------------------
# Wrapper: padding, pre-transposes, tiling and pallas_call
# ----------------------------------------------------------------------------
def q8_linear_lora(x, w_q, w_scales, bias, lora_a, lora_b,
                   fuse_gelu: bool = False, out_dtype=jnp.bfloat16):
    *lead, K = x.shape
    M = int(np.prod(lead)) if lead else 1
    N = w_q.shape[0]
    r = lora_a.shape[0]

    use_int8 = _mxu_supports_int8()
    qdtype = jnp.int8 if use_int8 else jnp.bfloat16

    # Tile sizes. K stays untiled per block (per-row amax needs the full row).
    tm = 128 if M >= 128 else _round_up(M, 16)
    if N >= 512 and N % 512 == 0:
        tn = 512
    elif N >= 256 and N % 256 == 0:
        tn = 256
    else:
        tn = 128
    M_pad = _round_up(M, tm)
    N_pad = _round_up(N, tn)
    r_pad = _round_up(r, 128)
    grid_m, grid_n = M_pad // tm, N_pad // tn

    # Padded / pre-transposed operands (one-time HBM work, amortized).
    x2 = jnp.pad(x.reshape(M, K).astype(jnp.bfloat16), ((0, M_pad - M), (0, 0)))
    h_sign = _hadamard_sign(K).astype(jnp.bfloat16)                     # [K, K] +/-1
    w_t = jnp.pad(w_q, ((0, N_pad - N), (0, 0))).T                      # [K, N_pad] int8
    wscale2 = jnp.pad(w_scales.astype(jnp.float32), (0, N_pad - N),
                      constant_values=1.0).reshape(1, N_pad)
    bias2 = jnp.pad(bias.astype(jnp.float32), (0, N_pad - N)).reshape(1, N_pad)
    laT = jnp.pad(lora_a.astype(jnp.bfloat16), ((0, r_pad - r), (0, 0))).T  # [K, r_pad]
    lbT = jnp.pad(lora_b.astype(jnp.bfloat16),
                  ((0, N_pad - N), (0, r_pad - r))).T                   # [r_pad, N_pad]

    kernel = functools.partial(
        _q8_linear_lora_kernel,
        fuse_gelu=fuse_gelu,
        use_int8=use_int8,
        dequant_const=1.0 / (127.0 * math.sqrt(K)))

    out = pl.pallas_call(
        kernel,
        out_shape=jax.ShapeDtypeStruct((M_pad, N_pad), out_dtype),
        grid_spec=pltpu.PrefetchScalarGridSpec(
            num_scalar_prefetch=0,
            grid=(grid_m, grid_n),
            in_specs=[
                pl.BlockSpec((tm, K), lambda i, j: (i, 0)),        # x (bf16)
                pl.BlockSpec((K, K), lambda i, j: (0, 0)),         # Hadamard sign (bf16)
                pl.BlockSpec((K, tn), lambda i, j: (0, j)),        # W^T (int8)
                pl.BlockSpec((1, tn), lambda i, j: (0, j)),        # weight scales (f32)
                pl.BlockSpec((1, tn), lambda i, j: (0, j)),        # bias (f32)
                pl.BlockSpec((K, r_pad), lambda i, j: (0, 0)),     # lora_a^T (bf16)
                pl.BlockSpec((r_pad, tn), lambda i, j: (0, j)),    # lora_b^T (bf16)
            ],
            out_specs=pl.BlockSpec((tm, tn), lambda i, j: (i, j)),
            scratch_shapes=[
                pltpu.VMEM((tm, K), qdtype),          # cached quantized activations
                pltpu.VMEM((tm, 1), jnp.float32),     # cached per-row dequant scale
                pltpu.VMEM((tm, r_pad), jnp.bfloat16) # cached LoRA down-projection
            ]),
        compiler_params=pltpu.CompilerParams(
            dimension_semantics=("parallel", "arbitrary")),
    )(x2, h_sign, w_t, wscale2, bias2, laT, lbT)

    return out[:M, :N].reshape(*lead, N)


# ----------------------------------------------------------------------------
# Pure-JAX reference (mirrors Q8F.linear.q8_linear_lora with use_hadamard=True)
# ----------------------------------------------------------------------------
def q8_linear_lora_ref(x, w_q, w_scales, bias, lora_a, lora_b, fuse_gelu=False):
    *lead, K = x.shape
    N = w_q.shape[0]
    xf = x.astype(jnp.float32).reshape(-1, K)
    h = _hadamard_sign(K) / math.sqrt(K)
    xh = xf @ h
    amax = jnp.max(jnp.abs(xh), axis=-1, keepdims=True)
    scale = amax / 127.0
    safe = jnp.where(scale == 0.0, 1.0, scale)
    xq = jnp.clip(jnp.round(xh / safe), -127.0, 127.0)
    acc = xq @ w_q.astype(jnp.float32).T
    out = acc * scale * w_scales.astype(jnp.float32)[None, :] \
        + bias.astype(jnp.float32)[None, :]
    la = xf @ lora_a.astype(jnp.float32).T
    out = out + la @ lora_b.astype(jnp.float32).T
    if fuse_gelu:
        out = 0.5 * out * (1.0 + jnp.tanh(
            0.7978845608028654 * (out + 0.044715 * out * out * out)))
    return out.reshape(*lead, N)


# ----------------------------------------------------------------------------
# Deterministic parameter construction mirroring Q8LinearLora.from_linear
# (hadamard-quantized int8 weight, normal(std=1/r) lora_a, zeros lora_b, f32 bias)
# ----------------------------------------------------------------------------
def make_q8_linear_lora_params(key, in_features, out_features, r):
    k_w, k_b, k_la = jax.random.split(key, 3)
    w16 = jax.random.normal(k_w, (out_features, in_features), jnp.float32) * 0.05
    h_norm = _hadamard_sign(in_features) / math.sqrt(in_features)
    w_h = w16 @ h_norm                                           # H symmetric
    amax = jnp.max(jnp.abs(w_h), axis=-1, keepdims=True)
    w_scales = (amax / 127.0).reshape(out_features)              # f32 [N]
    w_q = jnp.clip(jnp.round(w_h * (127.0 / amax)), -127, 127).astype(jnp.int8)
    bias = jax.random.normal(k_b, (out_features,), jnp.float32) * 0.1
    lora_a = (jax.random.normal(k_la, (r, in_features), jnp.float32)
              * (1.0 / r)).astype(jnp.bfloat16)
    lora_b = jnp.zeros((out_features, r), jnp.bfloat16)          # nn.init.zeros_
    return w_q, w_scales, bias, lora_a, lora_b


if __name__ == "__main__":
    in_features, out_features, r = 32, 64, 8
    batch, seq = 2, 8

    key = jax.random.PRNGKey(0)
    k_params, k_x = jax.random.split(key)

    w_q, w_scales, bias, lora_a, lora_b = make_q8_linear_lora_params(
        k_params, in_features, out_features, r)

    x = jax.random.normal(k_x, (batch, seq, in_features), jnp.float32)
    x = x.astype(jnp.bfloat16)

    out = q8_linear_lora(x, w_q, w_scales, bias, lora_a, lora_b,
                         fuse_gelu=False, out_dtype=jnp.bfloat16)
    out = jax.block_until_ready(out)

    assert out.shape == (batch, seq, out_features), out.shape
    assert out.dtype == jnp.bfloat16
    out_f32 = np.asarray(out.astype(jnp.float32))
    assert np.all(np.isfinite(out_f32))

    ref = np.asarray(q8_linear_lora_ref(x, w_q, w_scales, bias, lora_a, lora_b))
    np.testing.assert_allclose(out_f32, ref, atol=5e-2, rtol=5e-2)

    print("KERNEL_OK")
</pallas_src>

<mosaic_0001>
module attributes {stable_mosaic.version = 11 : i64} {
  func.func @_q8_linear_lora_kernel(%arg0: i32, %arg1: i32, %arg2: memref<16x32xbf16, #tpu.memory_space<vmem>>, %arg3: memref<32x32xbf16, #tpu.memory_space<vmem>>, %arg4: memref<32x128xi8, #tpu.memory_space<vmem>>, %arg5: memref<1x128xf32, #tpu.memory_space<vmem>>, %arg6: memref<1x128xf32, #tpu.memory_space<vmem>>, %arg7: memref<32x128xbf16, #tpu.memory_space<vmem>>, %arg8: memref<128x128xbf16, #tpu.memory_space<vmem>>, %arg9: memref<16x128xbf16, #tpu.memory_space<vmem>>, %arg10: memref<16x32xbf16, #tpu.memory_space<vmem>>, %arg11: memref<16x1xf32, #tpu.memory_space<vmem>>, %arg12: memref<16x128xbf16, #tpu.memory_space<vmem>>) attributes {dimension_semantics = [#tpu.dimension_semantics<parallel>, #tpu.dimension_semantics<arbitrary>], iteration_bounds = array<i64: 1, 1>, scalar_prefetch = 0 : i64, scratch_operands = 3 : i64, tpu.core_type = #tpu.core_type<tc>, window_params = [{transform_indices = @transform_0, window_bounds = array<i64: 16, 32>}, {pipeline_mode = #tpu.pipeline_mode<synchronous>, transform_indices = @transform_1, window_bounds = array<i64: 32, 32>}, {transform_indices = @transform_2, window_bounds = array<i64: 32, 128>}, {transform_indices = @transform_3, window_bounds = array<i64: 1, 128>}, {transform_indices = @transform_4, window_bounds = array<i64: 1, 128>}, {pipeline_mode = #tpu.pipeline_mode<synchronous>, transform_indices = @transform_5, window_bounds = array<i64: 32, 128>}, {transform_indices = @transform_6, window_bounds = array<i64: 128, 128>}, {transform_indices = @transform_7, window_bounds = array<i64: 16, 128>}]} {
    %c0_i32 = arith.constant 0 : i32
    %0 = arith.cmpi eq, %arg1, %c0_i32 : i32
    %1 = arith.extui %0 : i1 to i32
    %c0_i32_0 = arith.constant 0 : i32
    %2 = arith.cmpi ne, %1, %c0_i32_0 : i32
    scf.if %2 {
      %c0_17 = arith.constant 0 : index
      %c0_18 = arith.constant 0 : index
      %22 = vector.load %arg2[%c0_17, %c0_18] : memref<16x32xbf16, #tpu.memory_space<vmem>>, vector<16x32xbf16>
      %c0_19 = arith.constant 0 : index
      %c0_20 = arith.constant 0 : index
      %23 = vector.load %arg3[%c0_19, %c0_20] : memref<32x32xbf16, #tpu.memory_space<vmem>>, vector<32x32xbf16>
      %cst_21 = arith.constant dense<0.000000e+00> : vector<16x32xf32>
      %24 = tpu.matmul %22, %23, %cst_21 {dimension_numbers = #tpu.dot_dimension_numbers<[1], [0], [0], [1], [0, 0, 1, 1], [], []>} : vector<16x32xbf16>, vector<32x32xbf16>, vector<16x32xf32> -> vector<16x32xf32>
      %25 = math.absf %24 : vector<16x32xf32>
      %cst_22 = arith.constant dense<0xFF800000> : vector<16xf32>
      %26 = vector.multi_reduction <maximumf>, %25, %cst_22 [1] : vector<16x32xf32> to vector<16xf32>
      %27 = vector.shape_cast %26 : vector<16xf32> to vector<16x1xf32>
      %cst_23 = arith.constant 0.000000e+00 : f32
      %28 = vector.broadcast %cst_23 : f32 to vector<16x1xf32>
      %29 = arith.cmpf ogt, %27, %28 : vector<16x1xf32>
      %cst_24 = arith.constant 1.000000e+00 : f32
      %30 = vector.broadcast %cst_24 : f32 to vector<16x1xf32>
      %31 = arith.select %29, %27, %30 : vector<16x1xi1>, vector<16x1xf32>
      %cst_25 = arith.constant 1.270000e+02 : f32
      %32 = vector.broadcast %cst_25 : f32 to vector<16x1xf32>
      %33 = arith.divf %32, %31 : vector<16x1xf32>
      %34 = vector.broadcast %33 : vector<16x1xf32> to vector<16x32xf32>
      %35 = arith.mulf %24, %34 : vector<16x32xf32>
      %36 = math.roundeven %35 : vector<16x32xf32>
      %cst_26 = arith.constant -1.270000e+02 : f32
      %cst_27 = arith.constant 1.270000e+02 : f32
      %37 = vector.broadcast %cst_26 : f32 to vector<16x32xf32>
      %38 = arith.maximumf %37, %36 : vector<16x32xf32>
      %39 = vector.broadcast %cst_27 : f32 to vector<16x32xf32>
      %40 = arith.minimumf %39, %38 : vector<16x32xf32>
      %41 = arith.truncf %40 : vector<16x32xf32> to vector<16x32xbf16>
      %c0_28 = arith.constant 0 : index
      %c0_29 = arith.constant 0 : index
      %42 = vector.load %arg10[%c0_28, %c0_29] : memref<16x32xbf16, #tpu.memory_space<vmem>>, vector<16x32xbf16>
      tpu.vector_store %arg10[%c0_28, %c0_29], %41 {strides = array<i32>} : memref<16x32xbf16, #tpu.memory_space<vmem>>, vector<16x32xbf16>,
      %cst_30 = arith.constant 0.0013919425 : f32
      %43 = vector.broadcast %cst_30 : f32 to vector<16x1xf32>
      %44 = arith.mulf %27, %43 : vector<16x1xf32>
      %c0_31 = arith.constant 0 : index
      %c0_32 = arith.constant 0 : index
      %45 = vector.load %arg11[%c0_31, %c0_32] : memref<16x1xf32, #tpu.memory_space<vmem>>, vector<16x1xf32>
      tpu.vector_store %arg11[%c0_31, %c0_32], %44 {strides = array<i32>} : memref<16x1xf32, #tpu.memory_space<vmem>>, vector<16x1xf32>,
      %c0_33 = arith.constant 0 : index
      %c0_34 = arith.constant 0 : index
      %46 = vector.load %arg2[%c0_33, %c0_34] : memref<16x32xbf16, #tpu.memory_space<vmem>>, vector<16x32xbf16>
      %c0_35 = arith.constant 0 : index
      %c0_36 = arith.constant 0 : index
      %47 = vector.load %arg7[%c0_35, %c0_36] : memref<32x128xbf16, #tpu.memory_space<vmem>>, vector<32x128xbf16>
      %cst_37 = arith.constant dense<0.000000e+00> : vector<16x128xf32>
      %48 = tpu.matmul %46, %47, %cst_37 {dimension_numbers = #tpu.dot_dimension_numbers<[1], [0], [0], [1], [0, 0, 1, 1], [], []>} : vector<16x32xbf16>, vector<32x128xbf16>, vector<16x128xf32> -> vector<16x128xf32>
      %49 = arith.truncf %48 : vector<16x128xf32> to vector<16x128xbf16>
      %c0_38 = arith.constant 0 : index
      %c0_39 = arith.constant 0 : index
      %50 = vector.load %arg12[%c0_38, %c0_39] : memref<16x128xbf16, #tpu.memory_space<vmem>>, vector<16x128xbf16>
      tpu.vector_store %arg12[%c0_38, %c0_39], %49 {strides = array<i32>} : memref<16x128xbf16, #tpu.memory_space<vmem>>, vector<16x128xbf16>,
    } else {
    }
    %c0 = arith.constant 0 : index
    %c0_1 = arith.constant 0 : index
    %3 = vector.load %arg10[%c0, %c0_1] : memref<16x32xbf16, #tpu.memory_space<vmem>>, vector<16x32xbf16>
    %c0_2 = arith.constant 0 : index
    %c0_3 = arith.constant 0 : index
    %4 = vector.load %arg4[%c0_2, %c0_3] : memref<32x128xi8, #tpu.memory_space<vmem>>, vector<32x128xi8>
    %5 = arith.sitofp %4 : vector<32x128xi8> to vector<32x128xbf16>
    %cst = arith.constant dense<0.000000e+00> : vector<16x128xf32>
    %6 = tpu.matmul %3, %5, %cst {dimension_numbers = #tpu.dot_dimension_numbers<[1], [0], [0], [1], [0, 0, 1, 1], [], []>} : vector<16x32xbf16>, vector<32x128xbf16>, vector<16x128xf32> -> vector<16x128xf32>
    %c0_4 = arith.constant 0 : index
    %c0_5 = arith.constant 0 : index
    %7 = vector.load %arg11[%c0_4, %c0_5] : memref<16x1xf32, #tpu.memory_space<vmem>>, vector<16x1xf32>
    %8 = vector.broadcast %7 : vector<16x1xf32> to vector<16x128xf32>
    %9 = arith.mulf %6, %8 : vector<16x128xf32>
    %c0_6 = arith.constant 0 : index
    %c0_7 = arith.constant 0 : index
    %10 = vector.load %arg5[%c0_6, %c0_7] : memref<1x128xf32, #tpu.memory_space<vmem>>, vector<1x128xf32>
    %11 = vector.broadcast %10 : vector<1x128xf32> to vector<16x128xf32>
    %12 = arith.mulf %9, %11 : vector<16x128xf32>
    %c0_8 = arith.constant 0 : index
    %c0_9 = arith.constant 0 : index
    %13 = vector.load %arg6[%c0_8, %c0_9] : memref<1x128xf32, #tpu.memory_space<vmem>>, vector<1x128xf32>
    %14 = vector.broadcast %13 : vector<1x128xf32> to vector<16x128xf32>
    %15 = arith.addf %12, %14 : vector<16x128xf32>
    %c0_10 = arith.constant 0 : index
    %c0_11 = arith.constant 0 : index
    %16 = vector.load %arg12[%c0_10, %c0_11] : memref<16x128xbf16, #tpu.memory_space<vmem>>, vector<16x128xbf16>
    %c0_12 = arith.constant 0 : index
    %c0_13 = arith.constant 0 : index
    %17 = vector.load %arg8[%c0_12, %c0_13] : memref<128x128xbf16, #tpu.memory_space<vmem>>, vector<128x128xbf16>
    %cst_14 = arith.constant dense<0.000000e+00> : vector<16x128xf32>
    %18 = tpu.matmul %16, %17, %cst_14 {dimension_numbers = #tpu.dot_dimension_numbers<[1], [0], [0], [1], [0, 0, 1, 1], [], []>} : vector<16x128xbf16>, vector<128x128xbf16>, vector<16x128xf32> -> vector<16x128xf32>
    %19 = arith.addf %15, %18 : vector<16x128xf32>
    %20 = arith.truncf %19 : vector<16x128xf32> to vector<16x128xbf16>
    %c0_15 = arith.constant 0 : index
    %c0_16 = arith.constant 0 : index
    %21 = vector.load %arg9[%c0_15, %c0_16] : memref<16x128xbf16, #tpu.memory_space<vmem>>, vector<16x128xbf16>
    tpu.vector_store %arg9[%c0_15, %c0_16], %20 {strides = array<i32>} : memref<16x128xbf16, #tpu.memory_space<vmem>>, vector<16x128xbf16>,
    return
  }
  func.func @transform_0(%arg0: i32, %arg1: i32) -> (i32, i32) {
    %c0_i32 = arith.constant 0 : i32
    %c0_i32_0 = arith.constant 0 : i32
    return %arg0, %c0_i32 : i32, i32
  }
  func.func @transform_1(%arg0: i32, %arg1: i32) -> (i32, i32) {
    %c0_i32 = arith.constant 0 : i32
    %c0_i32_0 = arith.constant 0 : i32
    %c0_i32_1 = arith.constant 0 : i32
    return %c0_i32, %c0_i32_0 : i32, i32
  }
  func.func @transform_2(%arg0: i32, %arg1: i32) -> (i32, i32) {
    %c0_i32 = arith.constant 0 : i32
    %c0_i32_0 = arith.constant 0 : i32
    return %c0_i32, %arg1 : i32, i32
  }
  func.func @transform_3(%arg0: i32, %arg1: i32) -> (i32, i32) {
    %c0_i32 = arith.constant 0 : i32
    %c0_i32_0 = arith.constant 0 : i32
    return %c0_i32, %arg1 : i32, i32
  }
  func.func @transform_4(%arg0: i32, %arg1: i32) -> (i32, i32) {
    %c0_i32 = arith.constant 0 : i32
    %c0_i32_0 = arith.constant 0 : i32
    return %c0_i32, %arg1 : i32, i32
  }
  func.func @transform_5(%arg0: i32, %arg1: i32) -> (i32, i32) {
    %c0_i32 = arith.constant 0 : i32
    %c0_i32_0 = arith.constant 0 : i32
    %c0_i32_1 = arith.constant 0 : i32
    return %c0_i32, %c0_i32_0 : i32, i32
  }
  func.func @transform_6(%arg0: i32, %arg1: i32) -> (i32, i32) {
    %c0_i32 = arith.constant 0 : i32
    %c0_i32_0 = arith.constant 0 : i32
    return %c0_i32, %arg1 : i32, i32
  }
  func.func @transform_7(%arg0: i32, %arg1: i32) -> (i32, i32) {
    %c0_i32 = arith.constant 0 : i32
    return %arg0, %arg1 : i32, i32
  }
}

</mosaic_0001>

<llo_original>
// kernel: tpu_custom_call.1
$region0: #{tpu_custom_call.1}
  #allocation0 [shape = 'u32[]', space=smem, size = 0x4, offset = 0x4, fixed_abs, tag = 'smem constant byte address 0x4 - core index']
  #allocation1 [shape = 'u32[72,128]{1,0:T(1,128)}', space=vmem, size = 0x9000, scoped, tag = 'internal scratch']
  #allocation2 [shape = 'bf16[16,32]{1,0:T(8,128)(2,1)}', space=vmem, size = 0x1000, scoped, tag = 'scratch operand']
  #allocation3 [shape = 'f32[16,1]{1,0:T(8,128)}', space=vmem, size = 0x2000, scoped, tag = 'scratch operand']
  #allocation4 [shape = 'bf16[16,128]{1,0:T(8,128)(2,1)}', space=vmem, size = 0x1000, scoped, tag = 'scratch operand']
  %s0 = inlined_call_operand.hbm [shape: bf16[16,32], index: 0, kind: input, shape index: {}]
  %s1 = inlined_call_operand.hbm [shape: bf16[32,32], index: 1, kind: input, shape index: {}]
  %s2 = inlined_call_operand.hbm [shape: s8[32,128], index: 2, kind: input, shape index: {}]
  %s3 = inlined_call_operand.vmem [shape: f32[1,128], index: 3, kind: input, shape index: {}]
  %s4 = inlined_call_operand.vmem [shape: f32[1,128], index: 4, kind: input, shape index: {}]
  %s5 = inlined_call_operand.hbm [shape: bf16[32,128], index: 5, kind: input, shape index: {}]
  %s6 = inlined_call_operand.hbm [shape: bf16[128,128], index: 6, kind: input, shape index: {}]
  %s7 = inlined_call_operand.hbm [shape: bf16[16,128], index: 7, kind: output, shape index: {}]
  %s8 = sld [smem:[#allocation0]]
  $region62: #{tpu_custom_call.1} parent=0
    _
  %s10 = ssub.s32 1, %s8
  %s11 = scalar_select 0, %s10, %s8
  $region1: #{tpu_custom_call.1} parent=0
    #allocation5 [shape = 'u8[4096]{0}', space=vmem, size = 0x1000, scoped, tag = 'input window, operand 0, single buffered']
    #allocation6 [shape = 's32[1]{0}', space=sflag, size = 0x4, scoped, tag = 'scoped memory for tpu_custom_call.1']
    #allocation7 [shape = 's32[1]{0}', space=sflag, size = 0x4, scoped, tag = 'scoped memory for tpu_custom_call.1']
    #allocation8 [shape = 'u8[8192]{0}', space=vmem, size = 0x2000, scoped, tag = 'input window, operand 1, single buffered']
    #allocation9 [shape = 's32[1]{0}', space=sflag, size = 0x4, scoped, tag = 'scoped memory for tpu_custom_call.1']
    #allocation10 [shape = 'u8[4096]{0}', space=vmem, size = 0x1000, scoped, tag = 'input window, operand 2, single buffered']
    #allocation11 [shape = 'u8[8192]{0}', space=vmem, size = 0x2000, scoped, tag = 'input window, operand 5, single buffered']
    #allocation12 [shape = 's32[1]{0}', space=sflag, size = 0x4, scoped, tag = 'scoped memory for tpu_custom_call.1']
    #allocation13 [shape = 'u8[32768]{0}', space=vmem, size = 0x8000, scoped, tag = 'input window, operand 6, single buffered']
    #allocation14 [shape = 'u8[4096]{0}', space=vmem, size = 0x1000, scoped, tag = 'output window, operand 0, single buffered']
    %12 = vsyncpa [#allocation6], 0
    %13 = vsyncpa [#allocation9], 0
    %14 = vsyncpa [#allocation12], 0
    %15 = vsyncpa [#allocation7], 0
    // Predicated region
    $region2: #{tpu_custom_call.1} parent=1 // pred_check
      _
    $region3: #{tpu_custom_call.1} parent=1 // pred_check_branch
      %17 = sbr.rel (0) target = $region5
    $region4: #{tpu_custom_call.1} parent=1 // pred_region
      %19 = vsyncadd [#allocation6], 0
      %s20 = sshll.u32 %s0, 4
      %s21 = int_to_ptr.hbm [resolvable:$true] %s20
      %s22 = sshll.u32 [#allocation5], 4
      %s23 = int_to_ptr.vmem [resolvable:$true] %s22
      %28 = dma.hbm_to_vmem [thread:$0]  %s21, 128, %s23, [#allocation6], 64, 64, 4
    $region5: #{tpu_custom_call.1} parent=1 // pred_fallthru
      _
    // Predicated region
    $region6: #{tpu_custom_call.1} parent=1 // pred_check
      _
    $region7: #{tpu_custom_call.1} parent=1 // pred_check_branch
      %30 = sbr.rel (0) target = $region9
    $region8: #{tpu_custom_call.1} parent=1 // pred_region
      %32 = vsyncadd [#allocation9], 0
      %s33 = sshll.u32 %s1, 4
      %s34 = int_to_ptr.hbm [resolvable:$true] %s33
      %s35 = sshll.u32 [#allocation8], 4
      %s36 = int_to_ptr.vmem [resolvable:$true] %s35
      %41 = dma.hbm_to_vmem [thread:$0]  %s34, 256, %s36, [#allocation9], 64, 64, 4
    $region9: #{tpu_custom_call.1} parent=1 // pred_fallthru
      _
    // Predicated region
    $region10: #{tpu_custom_call.1} parent=1 // pred_check
      _
    $region11: #{tpu_custom_call.1} parent=1 // pred_check_branch
      %43 = sbr.rel (0) target = $region13
    $region12: #{tpu_custom_call.1} parent=1 // pred_region
      %45 = vsyncadd [#allocation9], 0
      %s47 = sshll.u32 %s2, 4
      %s48 = int_to_ptr.hbm [resolvable:$true] %s47
      %s49 = sshll.u32 [#allocation10], 4
      %s50 = int_to_ptr.vmem [resolvable:$true] %s49
      %52 = dma.hbm_to_vmem [thread:$0]  %s48, 128, %s50, [#allocation9]
    $region13: #{tpu_custom_call.1} parent=1 // pred_fallthru
      _
    // Predicated region
    $region14: #{tpu_custom_call.1} parent=1 // pred_check
      _
    $region15: #{tpu_custom_call.1} parent=1 // pred_check_branch
      %54 = sbr.rel (0) target = $region17
    $region16: #{tpu_custom_call.1} parent=1 // pred_region
      _
    $region17: #{tpu_custom_call.1} parent=1 // pred_fallthru
      _
    // Predicated region
    $region18: #{tpu_custom_call.1} parent=1 // pred_check
      _
    $region19: #{tpu_custom_call.1} parent=1 // pred_check_branch
      %56 = sbr.rel (0) target = $region21
    $region20: #{tpu_custom_call.1} parent=1 // pred_region
      _
    $region21: #{tpu_custom_call.1} parent=1 // pred_fallthru
      _
    // Predicated region
    $region22: #{tpu_custom_call.1} parent=1 // pred_check
      _
    $region23: #{tpu_custom_call.1} parent=1 // pred_check_branch
      %58 = sbr.rel (0) target = $region25
    $region24: #{tpu_custom_call.1} parent=1 // pred_region
      %60 = vsyncadd [#allocation12], 0
      %s61 = sshll.u32 %s5, 4
      %s62 = int_to_ptr.hbm [resolvable:$true] %s61
      %s63 = sshll.u32 [#allocation11], 4
      %s64 = int_to_ptr.vmem [resolvable:$true] %s63
      %69 = dma.hbm_to_vmem [thread:$0]  %s62, 256, %s64, [#allocation12], 64, 64, 4
    $region25: #{tpu_custom_call.1} parent=1 // pred_fallthru
      _
    // Predicated region
    $region26: #{tpu_custom_call.1} parent=1 // pred_check
      _
    $region27: #{tpu_custom_call.1} parent=1 // pred_check_branch
      %71 = sbr.rel (0) target = $region29
    $region28: #{tpu_custom_call.1} parent=1 // pred_region
      %73 = vsyncadd [#allocation12], 0
      %s74 = sshll.u32 %s6, 4
      %s75 = int_to_ptr.hbm [resolvable:$true] %s74
      %s76 = sshll.u32 [#allocation13], 4
      %s77 = int_to_ptr.vmem [resolvable:$true] %s76
      %82 = dma.hbm_to_vmem [thread:$0]  %s75, 1024, %s77, [#allocation12], 64, 64, 4
    $region29: #{tpu_custom_call.1} parent=1 // pred_fallthru
      _
    // Predicated region
    $region30: #{tpu_custom_call.1} parent=1 // pred_check
      _
    $region31: #{tpu_custom_call.1} parent=1 // pred_check_branch
      %84 = sbr.rel (0) target = $region33
    $region32: #{tpu_custom_call.1} parent=1 // pred_region
      %86 = dma.done [#allocation6], 128
    $region33: #{tpu_custom_call.1} parent=1 // pred_fallthru
      _
    // Predicated region
    $region34: #{tpu_custom_call.1} parent=1 // pred_check
      _
    $region35: #{tpu_custom_call.1} parent=1 // pred_check_branch
      %88 = sbr.rel (0) target = $region37
    $region36: #{tpu_custom_call.1} parent=1 // pred_region
      %90 = dma.done [#allocation9], 256
    $region37: #{tpu_custom_call.1} parent=1 // pred_fallthru
      _
    // Predicated region
    $region38: #{tpu_custom_call.1} parent=1 // pred_check
      _
    $region39: #{tpu_custom_call.1} parent=1 // pred_check_branch
      %92 = sbr.rel (0) target = $region41
    $region40: #{tpu_custom_call.1} parent=1 // pred_region
      %94 = dma.done [#allocation9], 128
    $region41: #{tpu_custom_call.1} parent=1 // pred_fallthru
      _
    // Predicated region
    $region42: #{tpu_custom_call.1} parent=1 // pred_check
      _
    $region43: #{tpu_custom_call.1} parent=1 // pred_check_branch
      %96 = sbr.rel (0) target = $region45
    $region44: #{tpu_custom_call.1} parent=1 // pred_region
      %98 = dma.done [#allocation12], 256
    $region45: #{tpu_custom_call.1} parent=1 // pred_fallthru
      _
    // Predicated region
    $region46: #{tpu_custom_call.1} parent=1 // pred_check
      _
    $region47: #{tpu_custom_call.1} parent=1 // pred_check_branch
      %100 = sbr.rel (0) target = $region49
    $region48: #{tpu_custom_call.1} parent=1 // pred_region
      %102 = dma.done [#allocation12], 1024
    $region49: #{tpu_custom_call.1} parent=1 // pred_fallthru
      _
    %p104 = scmp.eq.s32.totalorder 0, 0
    // Predicated region
    $region50: #{tpu_custom_call.1} parent=1 // pred_check
      %p105 = pneg %p104
    $region51: #{tpu_custom_call.1} parent=1 // pred_check_branch
      %107 = sbr.rel (%p105) target = $region53
    $region52: #{tpu_custom_call.1} parent=1 // pred_region
      %v108 = vld [vmem:[#allocation5] sm:$0xf]
      %v109 = vld [vmem:[#allocation5 + $0x4] sm:$0xf]
      %v110 = vld [vmem:[#allocation8] sm:$0xf]
      %v111 = vld [vmem:[#allocation8 + $0x4] sm:$0xf]
      %v112 = vld [vmem:[#allocation8 + $0x8] sm:$0xf]
      %v113 = vld [vmem:[#allocation8 + $0xc] sm:$0xf]
      %v116 = vunpack.c.l.b16 %v108
      %v117 = vunpack.c.l.b16 %v109
      %v118 = vpack.c.b16 %v117, %v116
      %v123 = vunpack.c.l.b16 %v110
      %v124 = vunpack.c.l.b16 %v111
      %v125 = vunpack.c.l.b16 %v112
      %v126 = vunpack.c.l.b16 %v113
      %v127 = vpack.c.b16 %v124, %v123
      %v128 = vpack.c.b16 %v126, %v125
      %vm131 = vcmask 261120
      %v133 = vsel %vm131, %v118, 0
      %135 = vmatpush.bf16.msra.mxu0 0
      %136 = vmatpush.bf16.msra.mxu0 0
      %137 = vmatpush.bf16.msra.mxu0 0
      %138 = vmatpush.bf16.msra.mxu0 0
      %139 = vmatpush.bf16.msra.mxu0 0
      %140 = vmatpush.bf16.msra.mxu0 0
      %141 = vmatpush.bf16.msra.mxu0 %v128
      %142 = vmatpush.bf16.msra.mxu0 %v127
      %143 = vmatmul.bf16.gmra.mxu0 %v133
      %v144 = vpop.f32.mrf.mxu0
      %v145 = vadd.f32 0.0, %v144
      %v146 = vpop.f32.mrf.mxu0
      %v147 = vadd.f32 0.0, %v146
      %148 = vdwg.mxu0
      %v149 = vand.u32 2147483647, %v145
      %v150 = vand.u32 2147483647, %v147
      %v151 = vsel %vm131, %v149, -inf
      %152 = vmax.xlane.f32.xlu0 %v151
      %v153 = vpop.xlane.xlu0 %152
      %v154 = vsel %vm131, %v150, -inf
      %155 = vmax.xlane.f32.xlu0 %v154
      %v156 = vpop.xlane.xlu0 %155
      %vm157 = vcmp.gt.f32.partialorder %v153, 0.0
      %vm158 = vcmp.gt.f32.partialorder %v156, 0.0
      %v159 = vsel %vm157, %v153, 1.0
      %v160 = vsel %vm158, %v156, 1.0
      %v161 = vrcp.pop %v159
      %v162 = vmul.f32 %v159, %v161
      %v163 = vsub.f32 1.0, %v162
      %v164 = vmul.f32 %v161, %v163
      %v165 = vadd.f32 %v161, %v164
      %vm166 = vweird.f32 %v159
      %vm167 = vweird.f32 %v161
      %vm168 = vmor %vm166, %vm167
      %v169 = vsel %vm168, %v161, %v165
      %v170 = vand.u32 2147483647, %v159
      %vm171 = vcmp.eq.f32.partialorder %v170, 8.507059e+37
      %v172 = vand.u32 %v159, 2147483648
      %v173 = vor.u32 1.1754944e-38, %v172
      %v174 = vsel %vm171, %v173, %v169
      %v175 = vmul.f32 127.0, %v174
      %v176 = vrcp.pop %v160
      %v177 = vmul.f32 %v160, %v176
      %v178 = vsub.f32 1.0, %v177
      %v179 = vmul.f32 %v176, %v178
      %v180 = vadd.f32 %v176, %v179
      %vm181 = vweird.f32 %v160
      %vm182 = vweird.f32 %v176
      %vm183 = vmor %vm181, %vm182
      %v184 = vsel %vm183, %v176, %v180
      %v185 = vand.u32 2147483647, %v160
      %vm186 = vcmp.eq.f32.partialorder %v185, 8.507059e+37
      %v187 = vand.u32 %v160, 2147483648
      %v188 = vor.u32 1.1754944e-38, %v187
      %v189 = vsel %vm186, %v188, %v184
      %v190 = vmul.f32 127.0, %v189
      %v191 = vmul.f32 %v145, %v175
      %v192 = vmul.f32 %v147, %v190
      %v193 = vround.ne.pseudo %v191
      %v194 = vround.ne.pseudo %v192
      %v195 = vmax.f32 %v193, -127.0
      %v196 = vmax.f32 %v194, -127.0
      %v197 = vmin.f32 %v195, 127.0
      %v198 = vmin.f32 %v196, 127.0
      %v199 = vpack.c.bf16 %v197, %v197
      %v200 = vpack.c.bf16 %v198, %v198
      %vm201 = vcmask 257024
      %202 = vst.msk [vmem:[#allocation2] sm:$0xf] %vm201, %v199
      %203 = vst.msk [vmem:[#allocation2 + $0x4] sm:$0xf] %vm201, %v200
      %v204 = vmul.f32 %v153, 0.0013919425
      %v205 = vmul.f32 %v156, 0.0013919425
      %vm206 = vcmask 7168
      %207 = vst.msk [vmem:[#allocation3] sm:$0xff] %vm206, %v204
      %208 = vst.msk [vmem:[#allocation3 + $0x8] sm:$0xff] %vm206, %v205
      %v209 = vld [vmem:[#allocation5] sm:$0xf]
      %v210 = vld [vmem:[#allocation5 + $0x4] sm:$0xf]
      %v211 = vld [vmem:[#allocation11] sm:$0xf]
      %v212 = vld [vmem:[#allocation11 + $0x4] sm:$0xf]
      %v213 = vld [vmem:[#allocation11 + $0x8] sm:$0xf]
      %v214 = vld [vmem:[#allocation11 + $0xc] sm:$0xf]
      %v217 = vunpack.c.l.b16 %v209
      %v218 = vunpack.c.l.b16 %v210
      %v219 = vpack.c.b16 %v218, %v217
      %v224 = vunpack.c.l.b16 %v211
      %v225 = vunpack.c.l.b16 %v212
      %v226 = vunpack.c.l.b16 %v213
      %v227 = vunpack.c.l.b16 %v214
      %v228 = vpack.c.b16 %v225, %v224
      %v229 = vpack.c.b16 %v227, %v226
      %v233 = vsel %vm131, %v219, 0
      %235 = vmatpush.bf16.msra.mxu0 0
      %236 = vmatpush.bf16.msra.mxu0 0
      %237 = vmatpush.bf16.msra.mxu0 0
      %238 = vmatpush.bf16.msra.mxu0 0
      %239 = vmatpush.bf16.msra.mxu0 0
      %240 = vmatpush.bf16.msra.mxu0 0
      %241 = vmatpush.bf16.msra.mxu0 %v229
      %242 = vmatpush.bf16.msra.mxu0 %v228
      %243 = vmatmul.bf16.gmra.mxu0 %v233
      %v244 = vpop.f32.mrf.mxu0
      %v245 = vadd.f32 0.0, %v244
      %v246 = vpop.f32.mrf.mxu0
      %v247 = vadd.f32 0.0, %v246
      %248 = vdwg.mxu0
      %v249 = vpack.c.bf16 %v245, %v245
      %v250 = vpack.c.bf16 %v247, %v247
      %251 = vst [vmem:[#allocation4] sm:$0xf] %v249
      %252 = vst [vmem:[#allocation4 + $0x4] sm:$0xf] %v250
    $region53: #{tpu_custom_call.1} parent=1 // pred_fallthru
      _
    %v253 = vld [vmem:[#allocation2] sm:$0xf]
    %v254 = vld [vmem:[#allocation2 + $0x4] sm:$0xf]
    %v255 = vld [vmem:[#allocation10] sm:$0xff]
    %v256 = vunpack.c.0.s8 %v255
    %v257 = vunpack.c.1.s8 %v255
    %v258 = vunpack.c.2.s8 %v255
    %v259 = vunpack.c.3.s8 %v255
    %v260 = vcvt.s32.f32 %v256
    %v261 = vcvt.s32.f32 %v257
    %v262 = vcvt.s32.f32 %v258
    %v263 = vcvt.s32.f32 %v259
    %v264 = vpack.c.bf16 %v261, %v260
    %v265 = vpack.c.bf16 %v263, %v262
    %v268 = vunpack.c.l.b16 %v253
    %v269 = vunpack.c.l.b16 %v254
    %v270 = vpack.c.b16 %v269, %v268
    %vm271 = vcmask 261120
    %v273 = vsel %vm271, %v270, 0
    %275 = vmatpush.bf16.msra.mxu0 0
    %276 = vmatpush.bf16.msra.mxu0 0
    %277 = vmatpush.bf16.msra.mxu0 0
    %278 = vmatpush.bf16.msra.mxu0 0
    %279 = vmatpush.bf16.msra.mxu0 0
    %280 = vmatpush.bf16.msra.mxu0 0
    %281 = vmatpush.bf16.msra.mxu0 %v265
    %282 = vmatpush.bf16.msra.mxu0 %v264
    %283 = vmatmul.bf16.gmra.mxu0 %v273
    %v284 = vpop.f32.mrf.mxu0
    %v285 = vadd.f32 0.0, %v284
    %v286 = vpop.f32.mrf.mxu0
    %v287 = vadd.f32 0.0, %v286
    %288 = vdwg.mxu0
    %v289 = vld [vmem:[#allocation3] sm:$0xff]
    %v290 = vld [vmem:[#allocation3 + $0x8] sm:$0xff]
    %292 = vset.pattern.permute.xlu0 0
    %293 = vperm.xlu0 %292, %v289
    %v294 = vpop.permute.xlu0 %293
    %297 = vset.pattern.permute.xlu0 0
    %298 = vperm.xlu0 %297, %v290
    %v299 = vpop.permute.xlu0 %298
    %v301 = vmul.f32 %v285, %v294
    %v302 = vmul.f32 %v287, %v299
    %v303 = vld [vmem:[%s3] sm:$0x1]
    %v305 = vperm.slane %v303, 0
    %v307 = vmul.f32 %v301, %v305
    %v308 = vmul.f32 %v302, %v305
    %v309 = vld [vmem:[%s4] sm:$0x1]
    %v311 = vperm.slane %v309, 0
    %v313 = vadd.f32 %v307, %v311
    %v314 = vadd.f32 %v308, %v311
    %v315 = vld [vmem:[#allocation4] sm:$0xf]
    %v316 = vld [vmem:[#allocation4 + $0x4] sm:$0xf]
    %v317 = vld [vmem:[#allocation13] sm:$0xf]
    %v318 = vld [vmem:[#allocation13 + $0x4] sm:$0xf]
    %v319 = vld [vmem:[#allocation13 + $0x8] sm:$0xf]
    %v320 = vld [vmem:[#allocation13 + $0xc] sm:$0xf]
    %v321 = vld [vmem:[#allocation13 + $0x10] sm:$0xf]
    %v322 = vld [vmem:[#allocation13 + $0x14] sm:$0xf]
    %v323 = vld [vmem:[#allocation13 + $0x18] sm:$0xf]
    %v324 = vld [vmem:[#allocation13 + $0x1c] sm:$0xf]
    %v325 = vld [vmem:[#allocation13 + $0x20] sm:$0xf]
    %v326 = vld [vmem:[#allocation13 + $0x24] sm:$0xf]
    %v327 = vld [vmem:[#allocation13 + $0x28] sm:$0xf]
    %v328 = vld [vmem:[#allocation13 + $0x2c] sm:$0xf]
    %v329 = vld [vmem:[#allocation13 + $0x30] sm:$0xf]
    %v330 = vld [vmem:[#allocation13 + $0x34] sm:$0xf]
    %v331 = vld [vmem:[#allocation13 + $0x38] sm:$0xf]
    %v332 = vld [vmem:[#allocation13 + $0x3c] sm:$0xf]
    %v335 = vunpack.c.l.b16 %v315
    %v336 = vunpack.c.l.b16 %v316
    %v337 = vpack.c.b16 %v336, %v335
    %v355 = vunpack.c.l.b16 %v317
    %v356 = vunpack.c.l.b16 %v318
    %v357 = vunpack.c.l.b16 %v319
    %v358 = vunpack.c.l.b16 %v320
    %v359 = vunpack.c.l.b16 %v321
    %v360 = vunpack.c.l.b16 %v322
    %v361 = vunpack.c.l.b16 %v323
    %v362 = vunpack.c.l.b16 %v324
    %v363 = vunpack.c.l.b16 %v325
    %v364 = vunpack.c.l.b16 %v326
    %v365 = vunpack.c.l.b16 %v327
    %v366 = vunpack.c.l.b16 %v328
    %v367 = vunpack.c.l.b16 %v329
    %v368 = vunpack.c.l.b16 %v330
    %v369 = vunpack.c.l.b16 %v331
    %v370 = vunpack.c.l.b16 %v332
    %v371 = vpack.c.b16 %v356, %v355
    %v372 = vpack.c.b16 %v358, %v357
    %v373 = vpack.c.b16 %v360, %v359
    %v374 = vpack.c.b16 %v362, %v361
    %v375 = vpack.c.b16 %v364, %v363
    %v376 = vpack.c.b16 %v366, %v365
    %v377 = vpack.c.b16 %v368, %v367
    %v378 = vpack.c.b16 %v370, %v369
    %387 = vmatpush.bf16.msra.mxu0 %v378
    %388 = vmatpush.bf16.msra.mxu0 %v377
    %389 = vmatpush.bf16.msra.mxu0 %v376
    %390 = vmatpush.bf16.msra.mxu0 %v375
    %391 = vmatpush.bf16.msra.mxu0 %v374
    %392 = vmatpush.bf16.msra.mxu0 %v373
    %393 = vmatpush.bf16.msra.mxu0 %v372
    %394 = vmatpush.bf16.msra.mxu0 %v371
    %395 = vmatmul.bf16.gmra.mxu0 %v337
    %v396 = vpop.f32.mrf.mxu0
    %v397 = vadd.f32 0.0, %v396
    %v398 = vpop.f32.mrf.mxu0
    %v399 = vadd.f32 0.0, %v398
    %400 = vdwg.mxu0
    %v401 = vadd.f32 %v313, %v397
    %v402 = vadd.f32 %v314, %v399
    %v403 = vpack.c.bf16 %v401, %v401
    %v404 = vpack.c.bf16 %v402, %v402
    %405 = vst [vmem:[#allocation14] sm:$0xf] %v403
    %406 = vst [vmem:[#allocation14 + $0x4] sm:$0xf] %v404
    // Predicated region
    $region54: #{tpu_custom_call.1} parent=1 // pred_check
      _
    $region55: #{tpu_custom_call.1} parent=1 // pred_check_branch
      %408 = sbr.rel (0) target = $region57
    $region56: #{tpu_custom_call.1} parent=1 // pred_region
      %410 = vsyncadd [#allocation7], 0
      %s411 = sshll.u32 [#allocation14], 4
      %s412 = int_to_ptr.vmem [resolvable:$true] %s411
      %s413 = sshll.u32 %s7, 4
      %s414 = int_to_ptr.hbm [resolvable:$true] %s413
      %419 = dma.vmem_to_hbm [thread:$0]  %s412, 128, %s414, [#allocation7], 64, 64, 4
    $region57: #{tpu_custom_call.1} parent=1 // pred_fallthru
      _
    // Predicated region
    $region58: #{tpu_custom_call.1} parent=1 // pred_check
      _
    $region59: #{tpu_custom_call.1} parent=1 // pred_check_branch
      %421 = sbr.rel (0) target = $region61
    $region60: #{tpu_custom_call.1} parent=1 // pred_region
      %423 = dma.done [#allocation7], 128
    $region61: #{tpu_custom_call.1} parent=1 // pred_fallthru
      _
    %424 = vsyncpa [#allocation6], 1
    %425 = vsyncpa [#allocation9], 1
    %426 = vsyncpa [#allocation12], 1
    %427 = vsyncpa [#allocation7], 1

</llo_original>
